<compile_context>
chip_gen: v7x
topology: tpu7x:2x2x1
jax: 0.10.0
libtpu: 0.0.40
codegen_flags: <defaults>
</compile_context>

<pallas_src>
import functools

import jax
import jax.numpy as jnp
from jax.experimental import pallas as pl
from jax.experimental.pallas import tpu as pltpu


def _mlp_kernel(xt_ref, w1t_ref, b1_ref, w2_ref, b2_ref, o_ref):
    # xt_ref : (4, TB) f32   batch on lanes
    # w1t_ref: (6, 4)  f32   (out_features, in_features)
    # b1_ref : (6, 1)  f32
    # w2_ref : (6, 1)  f32
    # b2_ref : (1, 1)  f32
    # o_ref  : (1, TB) f32   lane-dense output tile
    xt = xt_ref[...]

    # fc1 (K=4) as unrolled VPU MACs:
    #   (6,1) weight column lane-broadcast  *  (1,TB) input row sublane-broadcast
    acc = w1t_ref[:, 0:1] * xt[0:1, :]
    for k in range(1, 4):
        acc = acc + w1t_ref[:, k:k + 1] * xt[k:k + 1, :]
    h = jax.nn.sigmoid(acc + b1_ref[...])                     # (6, TB)

    # fc2 (K=6): elementwise scale, cross-sublane reduce (XLU), bias, sigmoid.
    y = jnp.sum(h * w2_ref[...], axis=0, keepdims=True) + b2_ref[...]
    o_ref[...] = jax.nn.sigmoid(y).astype(o_ref.dtype)        # (1, TB)


@functools.partial(jax.jit, static_argnames=("tile_b",))
def mlp_forward(x, w1, b1, w2, b2, *, tile_b=2048):
    """x: (B, 4) f32; w1: (4, 6); b1: (1, 6); w2: (6, 1); b2: (1, 1) -> (B, 1)."""
    B, K = x.shape
    assert K == 4, x.shape
    # TODO(synk): for tiny B a plain XLA-fused forward beats any Pallas launch;
    # we always take the Pallas path here so the kernel is exercised.

    tile = 128 * pl.cdiv(tile_b, 128)            # lane-aligned batch tile
    tile = min(tile, 128 * pl.cdiv(B, 128))      # never larger than padded B
    bp = tile * pl.cdiv(B, tile)                 # padded batch, multiple of tile
    grid = (bp // tile,)

    # Lane-dense layout: batch on the last (lane) axis; pad with zeros.
    xt = jnp.pad(x.T, ((0, 0), (0, bp - B)))     # (4, bp)
    w1t = w1.T                                   # (6, 4)
    b1c = b1.reshape(6, 1)                       # (6, 1)
    w2c = w2.reshape(6, 1)                       # (6, 1)
    b2c = b2.reshape(1, 1)                       # (1, 1)

    out_t = pl.pallas_call(
        _mlp_kernel,
        out_shape=jax.ShapeDtypeStruct((1, bp), x.dtype),
        grid_spec=pl.GridSpec(
            grid=grid,
            in_specs=[
                pl.BlockSpec((4, tile), lambda i: (0, i)),   # x^T batch tile
                pl.BlockSpec((6, 4), lambda i: (0, 0)),      # W1^T (resident)
                pl.BlockSpec((6, 1), lambda i: (0, 0)),      # b1
                pl.BlockSpec((6, 1), lambda i: (0, 0)),      # W2
                pl.BlockSpec((1, 1), lambda i: (0, 0)),      # b2
            ],
            out_specs=pl.BlockSpec((1, tile), lambda i: (0, i)),
        ),
        compiler_params=pltpu.CompilerParams(
            dimension_semantics=("parallel",)),
    )(xt, w1t, b1c, w2c, b2c)

    return out_t[:, :B].T                        # back to (B, 1)


def init_params(key):
    """Deterministic init mimicking PyTorch nn.Linear default (uniform ±1/sqrt(fan_in)).

    Stored transposed vs. PyTorch so the reference is y = x @ W + b.
    """
    k1, k2, k3, k4 = jax.random.split(key, 4)
    bound1 = 1.0 / jnp.sqrt(4.0)
    bound2 = 1.0 / jnp.sqrt(6.0)
    w1 = jax.random.uniform(k1, (4, 6), jnp.float32, -bound1, bound1)
    b1 = jax.random.uniform(k2, (1, 6), jnp.float32, -bound1, bound1)
    w2 = jax.random.uniform(k3, (6, 1), jnp.float32, -bound2, bound2)
    b2 = jax.random.uniform(k4, (1, 1), jnp.float32, -bound2, bound2)
    return w1, b1, w2, b2


if __name__ == "__main__":
    key = jax.random.PRNGKey(0)
    kx, kp = jax.random.split(key)

    B = 200                                   # small, non-multiple of 128 -> tests padding
    x = jax.random.normal(kx, (B, 4), jnp.float32)
    w1, b1, w2, b2 = init_params(kp)

    # tile_b=128 -> padded B = 256, grid=(2,): exercises the tiled/parallel path.
    out = mlp_forward(x, w1, b1, w2, b2, tile_b=128)
    jax.block_until_ready(out)

    # Reference check in plain JAX.
    ref = jax.nn.sigmoid(jax.nn.sigmoid(x @ w1 + b1) @ w2 + b2)
    assert out.shape == (B, 1), out.shape
    assert jnp.allclose(out, ref, atol=1e-5), float(jnp.max(jnp.abs(out - ref)))
    print("KERNEL_OK")
</pallas_src>

<mosaic_0001>
module attributes {stable_mosaic.version = 11 : i64} {
  func.func @_mlp_kernel(%arg0: i32, %arg1: memref<4x128xf32, #tpu.memory_space<vmem>>, %arg2: memref<6x4xf32, #tpu.memory_space<vmem>>, %arg3: memref<6x1xf32, #tpu.memory_space<vmem>>, %arg4: memref<6x1xf32, #tpu.memory_space<vmem>>, %arg5: memref<1x1xf32, #tpu.memory_space<vmem>>, %arg6: memref<1x128xf32, #tpu.memory_space<vmem>>) attributes {dimension_semantics = [#tpu.dimension_semantics<parallel>], iteration_bounds = array<i64: 2>, scalar_prefetch = 0 : i64, scratch_operands = 0 : i64, tpu.core_type = #tpu.core_type<tc>, window_params = [{transform_indices = @transform_0, window_bounds = array<i64: 4, 128>}, {pipeline_mode = #tpu.pipeline_mode<synchronous>, transform_indices = @transform_1, window_bounds = array<i64: 6, 4>}, {pipeline_mode = #tpu.pipeline_mode<synchronous>, transform_indices = @transform_2, window_bounds = array<i64: 6, 1>}, {pipeline_mode = #tpu.pipeline_mode<synchronous>, transform_indices = @transform_3, window_bounds = array<i64: 6, 1>}, {pipeline_mode = #tpu.pipeline_mode<synchronous>, transform_indices = @transform_4, window_bounds = array<i64: 1, 1>}, {transform_indices = @transform_5, window_bounds = array<i64: 1, 128>}]} {
    %c0 = arith.constant 0 : index
    %c0_0 = arith.constant 0 : index
    %0 = vector.load %arg1[%c0, %c0_0] : memref<4x128xf32, #tpu.memory_space<vmem>>, vector<4x128xf32>
    %c0_1 = arith.constant 0 : index
    %c0_2 = arith.constant 0 : index
    %1 = vector.load %arg2[%c0_1, %c0_2] : memref<6x4xf32, #tpu.memory_space<vmem>>, vector<6x1xf32>
    %2 = vector.extract_strided_slice %0 {offsets = [0, 0], sizes = [1, 128], strides = [1, 1]} : vector<4x128xf32> to vector<1x128xf32>
    %3 = vector.broadcast %1 : vector<6x1xf32> to vector<6x128xf32>
    %4 = vector.broadcast %2 : vector<1x128xf32> to vector<6x128xf32>
    %5 = arith.mulf %3, %4 : vector<6x128xf32>
    %c0_3 = arith.constant 0 : index
    %c1 = arith.constant 1 : index
    %6 = vector.load %arg2[%c0_3, %c1] : memref<6x4xf32, #tpu.memory_space<vmem>>, vector<6x1xf32>
    %7 = vector.extract_strided_slice %0 {offsets = [1, 0], sizes = [1, 128], strides = [1, 1]} : vector<4x128xf32> to vector<1x128xf32>
    %8 = vector.broadcast %6 : vector<6x1xf32> to vector<6x128xf32>
    %9 = vector.broadcast %7 : vector<1x128xf32> to vector<6x128xf32>
    %10 = arith.mulf %8, %9 : vector<6x128xf32>
    %11 = arith.addf %5, %10 : vector<6x128xf32>
    %c0_4 = arith.constant 0 : index
    %c2 = arith.constant 2 : index
    %12 = vector.load %arg2[%c0_4, %c2] : memref<6x4xf32, #tpu.memory_space<vmem>>, vector<6x1xf32>
    %13 = vector.extract_strided_slice %0 {offsets = [2, 0], sizes = [1, 128], strides = [1, 1]} : vector<4x128xf32> to vector<1x128xf32>
    %14 = vector.broadcast %12 : vector<6x1xf32> to vector<6x128xf32>
    %15 = vector.broadcast %13 : vector<1x128xf32> to vector<6x128xf32>
    %16 = arith.mulf %14, %15 : vector<6x128xf32>
    %17 = arith.addf %11, %16 : vector<6x128xf32>
    %c0_5 = arith.constant 0 : index
    %c3 = arith.constant 3 : index
    %18 = vector.load %arg2[%c0_5, %c3] : memref<6x4xf32, #tpu.memory_space<vmem>>, vector<6x1xf32>
    %19 = vector.extract_strided_slice %0 {offsets = [3, 0], sizes = [1, 128], strides = [1, 1]} : vector<4x128xf32> to vector<1x128xf32>
    %20 = vector.broadcast %18 : vector<6x1xf32> to vector<6x128xf32>
    %21 = vector.broadcast %19 : vector<1x128xf32> to vector<6x128xf32>
    %22 = arith.mulf %20, %21 : vector<6x128xf32>
    %23 = arith.addf %17, %22 : vector<6x128xf32>
    %c0_6 = arith.constant 0 : index
    %c0_7 = arith.constant 0 : index
    %24 = vector.load %arg3[%c0_6, %c0_7] : memref<6x1xf32, #tpu.memory_space<vmem>>, vector<6x1xf32>
    %25 = vector.broadcast %24 : vector<6x1xf32> to vector<6x128xf32>
    %26 = arith.addf %23, %25 : vector<6x128xf32>
    %27 = arith.negf %26 : vector<6x128xf32>
    %28 = math.exp %27 : vector<6x128xf32>
    %cst = arith.constant 1.000000e+00 : f32
    %29 = vector.broadcast %cst : f32 to vector<6x128xf32>
    %30 = arith.addf %29, %28 : vector<6x128xf32>
    %31 = arith.divf %29, %30 : vector<6x128xf32>
    %c0_8 = arith.constant 0 : index
    %c0_9 = arith.constant 0 : index
    %32 = vector.load %arg4[%c0_8, %c0_9] : memref<6x1xf32, #tpu.memory_space<vmem>>, vector<6x1xf32>
    %33 = vector.broadcast %32 : vector<6x1xf32> to vector<6x128xf32>
    %34 = arith.mulf %31, %33 : vector<6x128xf32>
    %cst_10 = arith.constant dense<0.000000e+00> : vector<128xf32>
    %35 = vector.multi_reduction <add>, %34, %cst_10 [0] : vector<6x128xf32> to vector<128xf32>
    %36 = vector.shape_cast %35 : vector<128xf32> to vector<1x128xf32>
    %c0_11 = arith.constant 0 : index
    %c0_12 = arith.constant 0 : index
    %37 = vector.load %arg5[%c0_11, %c0_12] : memref<1x1xf32, #tpu.memory_space<vmem>>, vector<1x1xf32>
    %38 = vector.broadcast %37 : vector<1x1xf32> to vector<1x128xf32>
    %39 = arith.addf %36, %38 : vector<1x128xf32>
    %40 = arith.negf %39 : vector<1x128xf32>
    %41 = math.exp %40 : vector<1x128xf32>
    %cst_13 = arith.constant 1.000000e+00 : f32
    %42 = vector.broadcast %cst_13 : f32 to vector<1x128xf32>
    %43 = arith.addf %42, %41 : vector<1x128xf32>
    %44 = arith.divf %42, %43 : vector<1x128xf32>
    %c0_14 = arith.constant 0 : index
    %c0_15 = arith.constant 0 : index
    %45 = vector.load %arg6[%c0_14, %c0_15] : memref<1x128xf32, #tpu.memory_space<vmem>>, vector<1x128xf32>
    tpu.vector_store %arg6[%c0_14, %c0_15], %44 {strides = array<i32>} : memref<1x128xf32, #tpu.memory_space<vmem>>, vector<1x128xf32>,
    return
  }
  func.func @transform_0(%arg0: i32) -> (i32, i32) {
    %c0_i32 = arith.constant 0 : i32
    %c0_i32_0 = arith.constant 0 : i32
    return %c0_i32, %arg0 : i32, i32
  }
  func.func @transform_1(%arg0: i32) -> (i32, i32) {
    %c0_i32 = arith.constant 0 : i32
    %c0_i32_0 = arith.constant 0 : i32
    %c0_i32_1 = arith.constant 0 : i32
    return %c0_i32, %c0_i32_0 : i32, i32
  }
  func.func @transform_2(%arg0: i32) -> (i32, i32) {
    %c0_i32 = arith.constant 0 : i32
    %c0_i32_0 = arith.constant 0 : i32
    %c0_i32_1 = arith.constant 0 : i32
    return %c0_i32, %c0_i32_0 : i32, i32
  }
  func.func @transform_3(%arg0: i32) -> (i32, i32) {
    %c0_i32 = arith.constant 0 : i32
    %c0_i32_0 = arith.constant 0 : i32
    %c0_i32_1 = arith.constant 0 : i32
    return %c0_i32, %c0_i32_0 : i32, i32
  }
  func.func @transform_4(%arg0: i32) -> (i32, i32) {
    %c0_i32 = arith.constant 0 : i32
    %c0_i32_0 = arith.constant 0 : i32
    %c0_i32_1 = arith.constant 0 : i32
    return %c0_i32, %c0_i32_0 : i32, i32
  }
  func.func @transform_5(%arg0: i32) -> (i32, i32) {
    %c0_i32 = arith.constant 0 : i32
    %c0_i32_0 = arith.constant 0 : i32
    return %c0_i32, %arg0 : i32, i32
  }
}

</mosaic_0001>

<llo_original>
// kernel: mlp_forward.1
$region0: #{mlp_forward.1}
  #allocation0 [shape = 'u32[]', space=smem, size = 0x4, offset = 0x4, fixed_abs, tag = 'smem constant byte address 0x4 - core index']
  #allocation1 [shape = 'u32[144,128]{1,0:T(1,128)}', space=vmem, size = 0x12000, scoped, tag = 'internal scratch']
  #allocation2 [shape = 'f32[1,1]{1,0:T(1,128)S(1)}', space=vmem, size = 0x200, scoped, tag = 'scoped memory for mlp_forward.1']
  %s0 = inlined_call_operand.vmem [shape: f32[4,256], index: 0, kind: input, shape index: {}]
  %s1 = inlined_call_operand.vmem [shape: f32[6,4], index: 1, kind: input, shape index: {}]
  %s2 = inlined_call_operand.vmem [shape: f32[6,1], index: 2, kind: input, shape index: {}]
  %s3 = inlined_call_operand.vmem [shape: f32[6,1], index: 3, kind: input, shape index: {}]
  %s4 = inlined_call_operand.<no memory space> [shape: f32[1,1], index: 4, kind: input, shape index: {}]
  %s5 = inlined_call_operand.vmem [shape: f32[1,256], index: 5, kind: output, shape index: {}]
  %s6 = sld [smem:[#allocation0]]
  $region53: #{mlp_forward.1} parent=0
    _
  %s8 = ssub.s32 1, %s6
  %s9 = scalar_select 0, %s8, %s6
  %v10 = vstv %s4
  %11 = vst [vmem:[#allocation2] sm:$0x1] %v10
  loop: start=0, step=1, limit=4
  $region2: #{mlp_forward.1} parent=0 // loop_pre_header
    _
  $region3: #{mlp_forward.1} parent=0 // loop_header
    %s13 = sphi 0, %s17
    %p14 = scmp.ge.s32.totalorder %s13, 4
    %s23 = sphi 0, %s25
    %s26 = sphi 0, %s23
    %s27 = sphi 0, %s26
    %s43 = sphi 0, %s27
    %s47 = sphi 0, %s47
    %s49 = sphi 0, %s47
    %s50 = sphi 0, %s49
    %s64 = sphi 0, %s50
    %s68 = sphi 0, %s68
    %s70 = sphi 0, %s68
    %s71 = sphi 0, %s70
    %s85 = sphi 0, %s71
    %s89 = sphi 0, %s89
    %s91 = sphi 0, %s89
    %s92 = sphi 0, %s91
    %s106 = sphi 0, %s92
    %s110 = sphi 0, %s110
    %s112 = sphi 0, %s110
    %s113 = sphi 0, %s112
    %s127 = sphi 0, %s113
    %s133 = sphi 0, %s135
    %s136 = sphi 0, %s133
    %s137 = sphi 0, %s136
    %s153 = sphi 0, %s137
  $region4: #{mlp_forward.1} parent=0 // loop_header_branch
    %16 = sbr.rel (%p14) target = $region8
  $region5: #{mlp_forward.1} parent=0 // loop_body
    %s18 = ssub.s32 %s13, 1
    %s19 = ssub.s32 %s13, 2
    %s20 = sadd.s32 %s13, 1
    %s21 = ssub.s32 %s13, %s20
    %p22 = scmp.eq.s32.totalorder %s21, 0
    %s24 = sadd.s32 %s23, 1
    %s25 = scalar_select %p22, %s23, %s24
    %p28 = pneg %p22
    %p29 = scmp.eq.s32.totalorder %s13, 1
    %p30 = por %p28, %p29
    %p31 = scmp.ne.s32.totalorder %s23, %s26
    %p32 = scmp.eq.s32.totalorder %s13, 0
    %p33 = por %p31, %p32
    %p34 = scmp.ne.s32.totalorder %s23, %s26
    %p35 = scmp.eq.s32.totalorder %s18, 1
    %p36 = por %p34, %p35
    %p37 = scmp.ne.s32.totalorder %s26, %s27
    %p38 = scmp.eq.s32.totalorder %s18, 0
    %p39 = por %p37, %p38
    %p40 = scmp.ne.s32.totalorder %s26, %s27
    %p41 = scmp.eq.s32.totalorder %s19, 1
    %p42 = por %p40, %p41
    %p44 = scmp.ne.s32.totalorder %s27, %s43
    %p45 = scmp.eq.s32.totalorder %s19, 0
    %p46 = por %p44, %p45
    %s48 = sadd.s32 %s47, 1
    %p51 = scmp.eq.s32.totalorder %s13, 1
    %p52 = scmp.ne.s32.totalorder %s47, %s49
    %p53 = scmp.eq.s32.totalorder %s13, 0
    %p54 = por %p52, %p53
    %p55 = scmp.ne.s32.totalorder %s47, %s49
    %p56 = scmp.eq.s32.totalorder %s18, 1
    %p57 = por %p55, %p56
    %p58 = scmp.ne.s32.totalorder %s49, %s50
    %p59 = scmp.eq.s32.totalorder %s18, 0
    %p60 = por %p58, %p59
    %p61 = scmp.ne.s32.totalorder %s49, %s50
    %p62 = scmp.eq.s32.totalorder %s19, 1
    %p63 = por %p61, %p62
    %p65 = scmp.ne.s32.totalorder %s50, %s64
    %p66 = scmp.eq.s32.totalorder %s19, 0
    %p67 = por %p65, %p66
    %s69 = sadd.s32 %s68, 1
    %p72 = scmp.eq.s32.totalorder %s13, 1
    %p73 = scmp.ne.s32.totalorder %s68, %s70
    %p74 = scmp.eq.s32.totalorder %s13, 0
    %p75 = por %p73, %p74
    %p76 = scmp.ne.s32.totalorder %s68, %s70
    %p77 = scmp.eq.s32.totalorder %s18, 1
    %p78 = por %p76, %p77
    %p79 = scmp.ne.s32.totalorder %s70, %s71
    %p80 = scmp.eq.s32.totalorder %s18, 0
    %p81 = por %p79, %p80
    %p82 = scmp.ne.s32.totalorder %s70, %s71
    %p83 = scmp.eq.s32.totalorder %s19, 1
    %p84 = por %p82, %p83
    %p86 = scmp.ne.s32.totalorder %s71, %s85
    %p87 = scmp.eq.s32.totalorder %s19, 0
    %p88 = por %p86, %p87
    %s90 = sadd.s32 %s89, 1
    %p93 = scmp.eq.s32.totalorder %s13, 1
    %p94 = scmp.ne.s32.totalorder %s89, %s91
    %p95 = scmp.eq.s32.totalorder %s13, 0
    %p96 = por %p94, %p95
    %p97 = scmp.ne.s32.totalorder %s89, %s91
    %p98 = scmp.eq.s32.totalorder %s18, 1
    %p99 = por %p97, %p98
    %p100 = scmp.ne.s32.totalorder %s91, %s92
    %p101 = scmp.eq.s32.totalorder %s18, 0
    %p102 = por %p100, %p101
    %p103 = scmp.ne.s32.totalorder %s91, %s92
    %p104 = scmp.eq.s32.totalorder %s19, 1
    %p105 = por %p103, %p104
    %p107 = scmp.ne.s32.totalorder %s92, %s106
    %p108 = scmp.eq.s32.totalorder %s19, 0
    %p109 = por %p107, %p108
    %s111 = sadd.s32 %s110, 1
    %p114 = scmp.eq.s32.totalorder %s13, 1
    %p115 = scmp.ne.s32.totalorder %s110, %s112
    %p116 = scmp.eq.s32.totalorder %s13, 0
    %p117 = por %p115, %p116
    %p118 = scmp.ne.s32.totalorder %s110, %s112
    %p119 = scmp.eq.s32.totalorder %s18, 1
    %p120 = por %p118, %p119
    %p121 = scmp.ne.s32.totalorder %s112, %s113
    %p122 = scmp.eq.s32.totalorder %s18, 0
    %p123 = por %p121, %p122
    %p124 = scmp.ne.s32.totalorder %s112, %s113
    %p125 = scmp.eq.s32.totalorder %s19, 1
    %p126 = por %p124, %p125
    %p128 = scmp.ne.s32.totalorder %s113, %s127
    %p129 = scmp.eq.s32.totalorder %s19, 0
    %p130 = por %p128, %p129
    %s131 = ssub.s32 %s13, %s20
    %p132 = scmp.eq.s32.totalorder %s131, 0
    %s134 = sadd.s32 %s133, 1
    %s135 = scalar_select %p132, %s133, %s134
    %p138 = pneg %p132
    %p139 = scmp.eq.s32.totalorder %s13, 1
    %p140 = por %p138, %p139
    %p141 = scmp.ne.s32.totalorder %s133, %s136
    %p142 = scmp.eq.s32.totalorder %s13, 0
    %p143 = por %p141, %p142
    %p144 = scmp.ne.s32.totalorder %s133, %s136
    %p145 = scmp.eq.s32.totalorder %s18, 1
    %p146 = por %p144, %p145
    %p147 = scmp.ne.s32.totalorder %s136, %s137
    %p148 = scmp.eq.s32.totalorder %s18, 0
    %p149 = por %p147, %p148
    %p150 = scmp.ne.s32.totalorder %s136, %s137
    %p151 = scmp.eq.s32.totalorder %s19, 1
    %p152 = por %p150, %p151
    %p154 = scmp.ne.s32.totalorder %s137, %s153
    %p155 = scmp.eq.s32.totalorder %s19, 0
    %p156 = por %p154, %p155
    %p157 = scmp.le.s32.totalorder 1, %s13
    %p158 = scmp.lt.s32.totalorder %s13, 3
    %p159 = pnand %p157, %p158
    %p160 = pneg %p159
    // Predicated region
    $region9: #{mlp_forward.1} parent=5 // pred_check
      _
    $region10: #{mlp_forward.1} parent=5 // pred_check_branch
      %162 = sbr.rel (%p159) target = $region12
    $region11: #{mlp_forward.1} parent=5 // pred_region
      %s163 = ssub.s32 %s13, 1
      // Predicated region
      $region13: #{mlp_forward.1} parent=11 // pred_check
        %p164 = pneg %p60
      $region14: #{mlp_forward.1} parent=11 // pred_check_branch
        %166 = sbr.rel (%p164) target = $region16
      $region15: #{mlp_forward.1} parent=11 // pred_region
        _
      $region16: #{mlp_forward.1} parent=11 // pred_fallthru
        _
      // Predicated region
      $region17: #{mlp_forward.1} parent=11 // pred_check
        %p167 = pneg %p81
      $region18: #{mlp_forward.1} parent=11 // pred_check_branch
        %169 = sbr.rel (%p167) target = $region20
      $region19: #{mlp_forward.1} parent=11 // pred_region
        _
      $region20: #{mlp_forward.1} parent=11 // pred_fallthru
        _
      // Predicated region
      $region21: #{mlp_forward.1} parent=11 // pred_check
        %p170 = pneg %p102
      $region22: #{mlp_forward.1} parent=11 // pred_check_branch
        %172 = sbr.rel (%p170) target = $region24
      $region23: #{mlp_forward.1} parent=11 // pred_region
        _
      $region24: #{mlp_forward.1} parent=11 // pred_fallthru
        _
      // Predicated region
      $region25: #{mlp_forward.1} parent=11 // pred_check
        %p173 = pneg %p123
      $region26: #{mlp_forward.1} parent=11 // pred_check_branch
        %175 = sbr.rel (%p173) target = $region28
      $region27: #{mlp_forward.1} parent=11 // pred_region
        _
      $region28: #{mlp_forward.1} parent=11 // pred_fallthru
        _
    $region12: #{mlp_forward.1} parent=5 // pred_fallthru
      _
    %p176 = scmp.lt.s32.totalorder %s13, 2
    // Predicated region
    $region29: #{mlp_forward.1} parent=5 // pred_check
      %p177 = pneg %p176
    $region30: #{mlp_forward.1} parent=5 // pred_check_branch
      %179 = sbr.rel (%p177) target = $region32
    $region31: #{mlp_forward.1} parent=5 // pred_region
      // Predicated region
      $region33: #{mlp_forward.1} parent=31 // pred_check
        %p180 = pneg %p33
      $region34: #{mlp_forward.1} parent=31 // pred_check_branch
        %182 = sbr.rel (%p180) target = $region36
      $region35: #{mlp_forward.1} parent=31 // pred_region
        %p183 = scmp.lt.s32.totalorder %s13, 1
        %s184 = scalar_select %p183, %s13, 1
        %s185 = smul.addr %s184, 4
        %s186 = scalar_lea.vmem %s0, %s185
      $region36: #{mlp_forward.1} parent=31 // pred_fallthru
        _
    $region32: #{mlp_forward.1} parent=5 // pred_fallthru
      _
    %p187 = scmp.le.s32.totalorder 1, %s13
    %p188 = scmp.lt.s32.totalorder %s13, 3
    %p189 = pnand %p187, %p188
    %p190 = pneg %p189
    // Predicated region
    $region37: #{mlp_forward.1} parent=5 // pred_check
      _
    $region38: #{mlp_forward.1} parent=5 // pred_check_branch
      %192 = sbr.rel (%p189) target = $region40
    $region39: #{mlp_forward.1} parent=5 // pred_region
      %s193 = ssub.s32 %s13, 1
      %p194 = scmp.lt.s32.totalorder %s18, 1
      %s195 = scalar_select %p194, %s18, 1
      %s196 = smul.addr %s195, 4
      %s197 = scalar_lea.vmem %s0, %s196
      %p198 = pneg %p39
      %p199 = pneg %p36
      %p200 = pneg %p60
      %p201 = pneg %p57
      %p202 = pneg %p81
      %p203 = pneg %p78
      %p204 = pneg %p102
      %p205 = pneg %p99
      %p206 = pneg %p123
      %p207 = pneg %p120
      %p208 = pneg %p149
      %p209 = pneg %p146
      %p210 = scmp.lt.s32.totalorder %s18, 1
      %s211 = scalar_select %p210, %s18, 1
      %s212 = scalar_lea.vmem %s5, %s211
      %p213 = scmp.lt.s32.totalorder %s18, 1
      %s214 = scalar_select %p213, %s18, 1
      %s215 = smul.addr %s214, 4
      %s216 = scalar_lea.vmem %s0, %s215
      %p217 = scmp.lt.s32.totalorder %s18, 1
      %s218 = scalar_select %p217, %s18, 1
      %s219 = scalar_lea.vmem %s5, %s218
      %v220 = vld [vmem:[%s216] sm:$0xf]
      %v221 = vld [vmem:[%s1] sm:$0x3f]
      %223 = vset.pattern.permute.xlu0 0
      %224 = vperm.xlu0 %223, %v221
      %v225 = vpop.permute.xlu0 %224
      %v227 = vlaneseq
      %v228 = vshrl.u32 %v227, 7
      %v229 = vsub.s32 0, %v228
      %v230 = vrot.slane %v220, %v229
      %v231 = vmul.f32 %v225, %v230
      %232 = vset.pattern.permute.xlu0 1
      %233 = vperm.xlu0 %232, %v221
      %v234 = vpop.permute.xlu0 %233
      %v236 = vlaneseq
      %v237 = vshrl.u32 %v236, 7
      %v238 = vsub.s32 1, %v237
      %v239 = vrot.slane %v220, %v238
      %v240 = vmul.f32 %v234, %v239
      %v241 = vadd.f32 %v231, %v240
      %242 = vset.pattern.permute.xlu0 2
      %243 = vperm.xlu0 %242, %v221
      %v244 = vpop.permute.xlu0 %243
      %v246 = vlaneseq
      %v247 = vshrl.u32 %v246, 7
      %v248 = vsub.s32 2, %v247
      %v249 = vrot.slane %v220, %v248
      %v250 = vmul.f32 %v244, %v249
      %v251 = vadd.f32 %v241, %v250
      %252 = vset.pattern.permute.xlu0 3
      %253 = vperm.xlu0 %252, %v221
      %v254 = vpop.permute.xlu0 %253
      %v256 = vlaneseq
      %v257 = vshrl.u32 %v256, 7
      %v258 = vsub.s32 3, %v257
      %v259 = vrot.slane %v220, %v258
      %v260 = vmul.f32 %v254, %v259
      %v261 = vadd.f32 %v251, %v260
      %v262 = vld [vmem:[%s2] sm:$0x3f]
      %264 = vset.pattern.permute.xlu0 0
      %265 = vperm.xlu0 %264, %v262
      %v266 = vpop.permute.xlu0 %265
      %v268 = vadd.f32 %v261, %v266
      %v269 = vxor.u32 %v268, 2147483648
      %v270 = vmul.f32 %v269, 1.442695
      %v271 = vpow.pop %v270
      %v272 = vadd.f32 %v271, 1.0
      %v273 = vrcp.pop %v272
      %v274 = vmul.f32 1.0, %v273
      %v275 = vld [vmem:[%s3] sm:$0x3f]
      %277 = vset.pattern.permute.xlu0 0
      %278 = vperm.xlu0 %277, %v275
      %v279 = vpop.permute.xlu0 %278
      %v281 = vmul.f32 %v274, %v279
      %vm282 = vcmask 1045504
      %v283 = vsel %vm282, %v281, 0.0
      %v284 = vrot.slane %v283, 4
      %v285 = vadd.f32 %v283, %v284
      %v286 = vrot.slane %v285, 2
      %v287 = vadd.f32 %v285, %v286
      %v288 = vrot.slane %v287, 1
      %v289 = vadd.f32 %v287, %v288
      %v290 = vld [vmem:[#allocation2] sm:$0x1]
      %292 = vset.pattern.permute.xlu0 0
      %293 = vperm.xlu0 %292, %v290
      %v294 = vpop.permute.xlu0 %293
      %v296 = vlaneseq
      %v297 = vshrl.u32 %v296, 7
      %v298 = vsub.s32 0, %v297
      %v299 = vrot.slane %v294, %v298
      %v300 = vadd.f32 %v289, %v299
      %v301 = vxor.u32 %v300, 2147483648
      %v302 = vmul.f32 %v301, 1.442695
      %v303 = vpow.pop %v302
      %v304 = vadd.f32 %v303, 1.0
      %v305 = vrcp.pop %v304
      %v306 = vmul.f32 1.0, %v305
      %307 = vst [vmem:[%s219] sm:$0x1] %v306
      %p308 = scmp.lt.s32.totalorder %s18, 1
      %s309 = scalar_select %p308, %s18, 1
      %s310 = scalar_lea.vmem %s5, %s309
      // Predicated region
      $region41: #{mlp_forward.1} parent=39 // pred_check
        %p311 = pneg %p146
      $region42: #{mlp_forward.1} parent=39 // pred_check_branch
        %313 = sbr.rel (%p311) target = $region44
      $region43: #{mlp_forward.1} parent=39 // pred_region
        _
      $region44: #{mlp_forward.1} parent=39 // pred_fallthru
        _
    $region40: #{mlp_forward.1} parent=5 // pred_fallthru
      _
    %p314 = scmp.le.s32.totalorder 2, %s13
    // Predicated region
    $region45: #{mlp_forward.1} parent=5 // pred_check
      %p315 = pneg %p314
    $region46: #{mlp_forward.1} parent=5 // pred_check_branch
      %317 = sbr.rel (%p315) target = $region48
    $region47: #{mlp_forward.1} parent=5 // pred_region
      %s318 = ssub.s32 %s13, 2
      // Predicated region
      $region49: #{mlp_forward.1} parent=47 // pred_check
        %p319 = pneg %p152
      $region50: #{mlp_forward.1} parent=47 // pred_check_branch
        %321 = sbr.rel (%p319) target = $region52
      $region51: #{mlp_forward.1} parent=47 // pred_region
        %p322 = scmp.lt.s32.totalorder %s19, 1
        %s323 = scalar_select %p322, %s19, 1
        %s324 = scalar_lea.vmem %s5, %s323
      $region52: #{mlp_forward.1} parent=47 // pred_fallthru
        _
    $region48: #{mlp_forward.1} parent=5 // pred_fallthru
      _
  $region6: #{mlp_forward.1} parent=0 // loop_footer
    %s17 = sadd.s32 1, %s13
  $region7: #{mlp_forward.1} parent=0 // loop_footer_branch
    %12 = sbr.rel target = $region3
  $region8: #{mlp_forward.1} parent=0 // loop_exit
    _

</llo_original>
